<compile_context>
chip_gen: v5e
topology: v5e:2x2
jax: 0.10.0
libtpu: 0.0.40
codegen_flags: <defaults>
</compile_context>

<pallas_src>
import functools

import jax
import jax.numpy as jnp
import numpy as np
from jax import lax
from jax.experimental import pallas as pl
from jax.experimental.pallas import tpu as pltpu

_MiB = 1024 * 1024


# ----------------------------------------------------------------------------
# Hardware-aware tiling helpers.
# ----------------------------------------------------------------------------
def _tpu_vmem_capacity_bytes():
    try:
        return int(pltpu.get_tpu_info().vmem_capacity_bytes)
    except Exception:
        return 64 * _MiB                       # conservative (v7x-sized) fallback


def _is_v7x():
    try:
        kind = jax.devices()[0].device_kind.lower()
        return ("v7" in kind) or ("7x" in kind)
    except Exception:
        return False


def _pick_batch_tile(B):
    # v7x has 2 TensorCores/chip and time is inherently serial, so batch is the only
    # shardable axis.  Split only on v7x (1-TC chips would pay pure grid overhead)
    # and only when the split tile stays (8,)-aligned on the sublane axis.
    if _is_v7x() and B >= 16 and B % 2 == 0 and (B // 2) % 8 == 0:
        return B // 2
    return B


def _select_chunk(T, bb, H, xg_itemsize, out_itemsize, w_itemsize,
                  vmem_budget, max_chunk=32):
    """Time steps per grid step, derived from a VMEM byte budget."""
    fixed = (H * 4 * H * w_itemsize            # single-buffered W_hh scratch
             + 12 * bb * H * 4)                # h0/c0/hN/cN blocks + h/c scratch
    per_step = 2 * bb * (4 * H * xg_itemsize + H * out_itemsize)   # 2x-buffered xg+out
    avail = max(vmem_budget - fixed, per_step)
    chunk = int(max(1, min(T, max_chunk, avail // per_step)))
    if T % chunk == 0:
        return chunk, T
    # Prefer a divisor of T in [chunk//2, chunk] (avoids padding entirely).
    for c in range(chunk, max(1, chunk // 2) - 1, -1):
        if T % c == 0:
            return c, T
    # No good divisor (e.g. prime T): pad T to a chunk multiple and mask the tail.
    T_pad = ((T + chunk - 1) // chunk) * chunk
    return chunk, T_pad


# ----------------------------------------------------------------------------
# Pallas kernel: serial recurrence of one LSTM layer.
# Grid = (batch_tiles [parallel], time_chunks [arbitrary, sequential]).
# xg_ref holds x@W_ih^T + bias, gate-last: block (chunk, bb, 4H).
# ----------------------------------------------------------------------------
def _lstm_recurrence_kernel(xg_ref, h0_ref, c0_ref, whh_hbm,
                            out_ref, hN_ref, cN_ref,
                            h_scr, c_scr, whh_scr, dma_sem,
                            *, chunk, seq_len, hidden, unroll, mask_tail):
    t = pl.program_id(1)

    @pl.when(t == 0)
    def _():
        # W_hh is constant over the whole grid: DMA it once into a persistent
        # VMEM scratch (single-buffered) instead of pipelining it every step.
        cp = pltpu.make_async_copy(whh_hbm, whh_scr, dma_sem)
        cp.start()
        h_scr[...] = h0_ref[...]
        c_scr[...] = c0_ref[...]
        cp.wait()

    H = hidden
    w_dtype = whh_scr.dtype

    def step(tt, carry):
        h, c = carry
        # One fused (bb, H) x (H, 4H) MXU matmul per step; gate slices are
        # lane-aligned whenever H % 128 == 0 (small H is EUP/latency-bound anyway).
        gates = xg_ref[tt].astype(jnp.float32) + jnp.dot(
            h.astype(w_dtype), whh_scr[...], preferred_element_type=jnp.float32)
        i_g = jax.nn.sigmoid(gates[:, 0 * H:1 * H])
        f_g = jax.nn.sigmoid(gates[:, 1 * H:2 * H])
        g_g = jnp.tanh(gates[:, 2 * H:3 * H])
        o_g = jax.nn.sigmoid(gates[:, 3 * H:4 * H])
        c_new = f_g * c + i_g * g_g
        h_new = o_g * jnp.tanh(c_new)
        if mask_tail:
            valid = (t * chunk + tt) < seq_len
            h_new = jnp.where(valid, h_new, h)
            c_new = jnp.where(valid, c_new, c)
        out_ref[tt] = h_new.astype(out_ref.dtype)
        return h_new, c_new

    # Partial unroll keeps LLO visibility without spilling the 64-vreg file.
    h, c = lax.fori_loop(0, chunk, step, (h_scr[...], c_scr[...]), unroll=unroll)
    h_scr[...] = h
    c_scr[...] = c

    @pl.when(t == pl.num_programs(1) - 1)
    def _():
        hN_ref[...] = h.astype(hN_ref.dtype)
        cN_ref[...] = c.astype(cN_ref.dtype)


# ----------------------------------------------------------------------------
# One LSTM layer: hoisted input projection (XLA) + Pallas recurrence.
# ----------------------------------------------------------------------------
def _lstm_layer(x_tbd, h0, c0, w_ih, w_hh, b_ih, b_hh, *, compute_dtype):
    """x_tbd: (T, B, D_in); h0/c0: (B, H); PyTorch-layout weights."""
    T, B, D = x_tbd.shape
    H = w_hh.shape[1]
    G = 4 * H
    cd = jnp.dtype(compute_dtype)

    bb = _pick_batch_tile(B)
    nb = B // bb

    vmem_cap = _tpu_vmem_capacity_bytes()
    chunk, T_pad = _select_chunk(T, bb, H, cd.itemsize, 4, cd.itemsize,
                                 vmem_budget=int(0.55 * vmem_cap))
    nt = T_pad // chunk
    mask_tail = T_pad != T

    # Hoisted, fully parallel input projection (off the serial critical path) as one
    # plain (T*B, D) x (D, 4H) matmul; gate-last layout [i | f | g | o].
    bias = (b_ih + b_hh).astype(jnp.float32)
    xg = jnp.dot(x_tbd.reshape(T * B, D).astype(cd), w_ih.T.astype(cd),
                 preferred_element_type=jnp.float32) + bias
    xg = xg.reshape(T, B, G).astype(cd)
    if mask_tail:
        xg = jnp.pad(xg, ((0, T_pad - T), (0, 0), (0, 0)))

    # Recurrent weights, pre-transposed gate-last: h @ whh_t == h @ W_hh.T.
    whh_t = w_hh.T.astype(cd)                                       # (H, 4H)

    h0 = h0.astype(jnp.float32)
    c0 = c0.astype(jnp.float32)

    kernel = functools.partial(
        _lstm_recurrence_kernel, chunk=chunk, seq_len=T, hidden=H,
        unroll=min(8, chunk), mask_tail=mask_tail)

    # Resident-VMEM estimate; raise the scoped limit only when the small default
    # (~16-32 MiB) would be exceeded, capped at ~75% of physical VMEM
    # (~48 MiB on v7x, ~96 MiB on v5e/v6e).
    est_bytes = (2 * chunk * bb * G * cd.itemsize      # xg blocks (2x buffered)
                 + 2 * chunk * bb * H * 4              # out blocks (2x buffered)
                 + H * G * cd.itemsize                 # W_hh scratch (1x)
                 + 12 * bb * H * 4)                    # state blocks + scratch
    compiler_kwargs = dict(dimension_semantics=("parallel", "arbitrary"))
    if est_bytes > 12 * _MiB:
        compiler_kwargs["vmem_limit_bytes"] = int(
            min(0.75 * vmem_cap, max(32 * _MiB, 1.5 * est_bytes)))

    out, hN, cN = pl.pallas_call(
        kernel,
        out_shape=(
            jax.ShapeDtypeStruct((T_pad, B, H), jnp.float32),
            jax.ShapeDtypeStruct((B, H), jnp.float32),
            jax.ShapeDtypeStruct((B, H), jnp.float32),
        ),
        grid_spec=pltpu.PrefetchScalarGridSpec(
            num_scalar_prefetch=0,
            grid=(nb, nt),
            in_specs=[
                pl.BlockSpec((chunk, bb, G), lambda b, t: (t, b, 0)),   # xg stream
                pl.BlockSpec((bb, H), lambda b, t: (b, 0)),             # h0
                pl.BlockSpec((bb, H), lambda b, t: (b, 0)),             # c0
                pl.BlockSpec(memory_space=pl.ANY),                      # W_hh (raw HBM)
            ],
            out_specs=[
                pl.BlockSpec((chunk, bb, H), lambda b, t: (t, b, 0)),   # per-step h
                pl.BlockSpec((bb, H), lambda b, t: (b, 0)),             # final h
                pl.BlockSpec((bb, H), lambda b, t: (b, 0)),             # final c
            ],
            scratch_shapes=[
                pltpu.VMEM((bb, H), jnp.float32),     # h carry
                pltpu.VMEM((bb, H), jnp.float32),     # c carry
                pltpu.VMEM((H, G), cd),               # single-buffered W_hh
                pltpu.SemaphoreType.DMA(()),          # W_hh copy completion
            ],
        ),
        compiler_params=pltpu.CompilerParams(**compiler_kwargs),
    )(xg, h0, c0, whh_t)

    if mask_tail:
        out = out[:T]
    return out, hN, cN


# ----------------------------------------------------------------------------
# Buffed_LSTM forward: multi-layer, batch_first semantics of nn.LSTM.
# ----------------------------------------------------------------------------
def buffed_lstm_forward(x_btd, params, hidden_state=None, cell_state=None,
                        *, compute_dtype=jnp.float32):
    """x_btd: (B, T, input_size). Returns (output, (hidden, cell)) like nn.LSTM."""
    B, T, _ = x_btd.shape
    num_layers = len(params)
    H = params[0]["w_hh"].shape[1]

    if hidden_state is None or cell_state is None:
        hidden_state = jnp.zeros((num_layers, B, H), jnp.float32)
        cell_state = jnp.zeros((num_layers, B, H), jnp.float32)

    x_tbd = jnp.transpose(x_btd, (1, 0, 2)).astype(jnp.float32)     # (T, B, D)

    # TODO(synk): fuse all layers into a single pallas_call (weights in pl.ANY,
    # inter-layer activations kept in VMEM) to avoid the HBM round trip per layer.
    h_finals, c_finals = [], []
    layer_in = x_tbd
    for l in range(num_layers):
        p = params[l]
        out, hN, cN = _lstm_layer(layer_in, hidden_state[l], cell_state[l],
                                  p["w_ih"], p["w_hh"], p["b_ih"], p["b_hh"],
                                  compute_dtype=compute_dtype)
        layer_in = out
        h_finals.append(hN)
        c_finals.append(cN)

    output = jnp.transpose(layer_in, (1, 0, 2))            # (B, T, H) batch_first
    hidden = jnp.stack(h_finals, axis=0)                   # (num_layers, B, H)
    cell = jnp.stack(c_finals, axis=0)                     # (num_layers, B, H)
    return output, (hidden, cell)


# ----------------------------------------------------------------------------
# Deterministic parameter init (PyTorch LSTM: U(-1/sqrt(H), 1/sqrt(H))).
# ----------------------------------------------------------------------------
def init_lstm_params(key, input_size, hidden_size, num_layers):
    k = 1.0 / np.sqrt(hidden_size)
    params = []
    for l in range(num_layers):
        in_sz = input_size if l == 0 else hidden_size
        key, k1, k2, k3, k4 = jax.random.split(key, 5)
        params.append({
            "w_ih": jax.random.uniform(k1, (4 * hidden_size, in_sz),
                                       jnp.float32, -k, k),
            "w_hh": jax.random.uniform(k2, (4 * hidden_size, hidden_size),
                                       jnp.float32, -k, k),
            "b_ih": jax.random.uniform(k3, (4 * hidden_size,),
                                       jnp.float32, -k, k),
            "b_hh": jax.random.uniform(k4, (4 * hidden_size,),
                                       jnp.float32, -k, k),
        })
    return params


# ----------------------------------------------------------------------------
# Pure-JAX reference (lax.scan) for correctness checks.
# ----------------------------------------------------------------------------
def reference_lstm(x_btd, params, h0, c0):
    x_tbd = jnp.transpose(x_btd, (1, 0, 2))
    H = params[0]["w_hh"].shape[1]
    layer_in = x_tbd
    h_fin, c_fin = [], []
    for l, p in enumerate(params):
        def step(carry, x_t, p=p):
            h, c = carry
            g = x_t @ p["w_ih"].T + h @ p["w_hh"].T + p["b_ih"] + p["b_hh"]
            i = jax.nn.sigmoid(g[:, :H])
            f = jax.nn.sigmoid(g[:, H:2 * H])
            gg = jnp.tanh(g[:, 2 * H:3 * H])
            o = jax.nn.sigmoid(g[:, 3 * H:])
            c_n = f * c + i * gg
            h_n = o * jnp.tanh(c_n)
            return (h_n, c_n), h_n
        (hN, cN), outs = jax.lax.scan(step, (h0[l], c0[l]), layer_in)
        layer_in = outs
        h_fin.append(hN)
        c_fin.append(cN)
    return (jnp.transpose(layer_in, (1, 0, 2)),
            (jnp.stack(h_fin), jnp.stack(c_fin)))


if __name__ == "__main__":
    # Small shapes consistent with nn.LSTM(batch_first=True).
    B, T = 2, 8
    INPUT_SIZE, HIDDEN_SIZE, NUM_LAYERS = 16, 32, 2

    key = jax.random.PRNGKey(0)
    k_param, k_x = jax.random.split(key)
    params = init_lstm_params(k_param, INPUT_SIZE, HIDDEN_SIZE, NUM_LAYERS)
    x = jax.random.normal(k_x, (B, T, INPUT_SIZE), jnp.float32)

    # 1) Strict f32 check against the pure-JAX reference.
    output, (hidden, cell) = buffed_lstm_forward(x, params)
    jax.block_until_ready((output, hidden, cell))

    h0 = jnp.zeros((NUM_LAYERS, B, HIDDEN_SIZE), jnp.float32)
    c0 = jnp.zeros((NUM_LAYERS, B, HIDDEN_SIZE), jnp.float32)
    ref_out, (ref_h, ref_c) = reference_lstm(x, params, h0, c0)

    assert output.shape == (B, T, HIDDEN_SIZE)
    assert hidden.shape == (NUM_LAYERS, B, HIDDEN_SIZE)
    assert cell.shape == (NUM_LAYERS, B, HIDDEN_SIZE)
    np.testing.assert_allclose(np.asarray(output), np.asarray(ref_out),
                               rtol=1e-5, atol=1e-5)
    np.testing.assert_allclose(np.asarray(hidden), np.asarray(ref_h),
                               rtol=1e-5, atol=1e-5)
    np.testing.assert_allclose(np.asarray(cell), np.asarray(ref_c),
                               rtol=1e-5, atol=1e-5)

    # 2) Awkward T (prime) exercises the padded-tail / masked-step path.
    T2 = 37
    x2 = jax.random.normal(jax.random.PRNGKey(1), (B, T2, INPUT_SIZE), jnp.float32)
    out2, (h2, c2) = buffed_lstm_forward(x2, params)
    jax.block_until_ready((out2, h2, c2))
    ref_out2, (ref_h2, ref_c2) = reference_lstm(x2, params, h0, c0)
    np.testing.assert_allclose(np.asarray(out2), np.asarray(ref_out2),
                               rtol=1e-5, atol=1e-5)
    np.testing.assert_allclose(np.asarray(h2), np.asarray(ref_h2),
                               rtol=1e-5, atol=1e-5)
    np.testing.assert_allclose(np.asarray(c2), np.asarray(ref_c2),
                               rtol=1e-5, atol=1e-5)

    # 3) bf16 fast path: smoke run + loose numerical check.
    out_bf, (h_bf, c_bf) = buffed_lstm_forward(x, params,
                                               compute_dtype=jnp.bfloat16)
    jax.block_until_ready((out_bf, h_bf, c_bf))
    np.testing.assert_allclose(np.asarray(out_bf), np.asarray(ref_out),
                               rtol=1e-1, atol=1e-1)

    print("KERNEL_OK")
</pallas_src>

<mosaic_0001>
module attributes {stable_mosaic.version = 11 : i64} {
  func.func @_lstm_recurrence_kernel(%arg0: i32, %arg1: i32, %arg2: memref<8x2x128xf32, #tpu.memory_space<vmem>>, %arg3: memref<2x32xf32, #tpu.memory_space<vmem>>, %arg4: memref<2x32xf32, #tpu.memory_space<vmem>>, %arg5: memref<32x128xf32, #tpu.memory_space<any>>, %arg6: memref<8x2x32xf32, #tpu.memory_space<vmem>>, %arg7: memref<2x32xf32, #tpu.memory_space<vmem>>, %arg8: memref<2x32xf32, #tpu.memory_space<vmem>>, %arg9: memref<2x32xf32, #tpu.memory_space<vmem>>, %arg10: memref<2x32xf32, #tpu.memory_space<vmem>>, %arg11: memref<32x128xf32, #tpu.memory_space<vmem>>, %arg12: memref<!tpu.dma_semaphore, #tpu.memory_space<semaphore_mem>>) attributes {dimension_semantics = [#tpu.dimension_semantics<parallel>, #tpu.dimension_semantics<arbitrary>], iteration_bounds = array<i64: 1, 1>, scalar_prefetch = 0 : i64, scratch_operands = 4 : i64, tpu.core_type = #tpu.core_type<tc>, window_params = [{transform_indices = @transform_0, window_bounds = array<i64: 8, 2, 128>}, {transform_indices = @transform_1, window_bounds = array<i64: 2, 32>}, {transform_indices = @transform_2, window_bounds = array<i64: 2, 32>}, {}, {transform_indices = @transform_4, window_bounds = array<i64: 8, 2, 32>}, {transform_indices = @transform_5, window_bounds = array<i64: 2, 32>}, {transform_indices = @transform_6, window_bounds = array<i64: 2, 32>}]} {
    %c0_i32 = arith.constant 0 : i32
    %0 = arith.cmpi eq, %arg1, %c0_i32 : i32
    %1 = arith.extui %0 : i1 to i32
    %c0_i32_0 = arith.constant 0 : i32
    %2 = arith.cmpi ne, %1, %c0_i32_0 : i32
    scf.if %2 {
      tpu.enqueue_dma source(%arg5 : memref<32x128xf32, #tpu.memory_space<any>>) target(%arg11 : memref<32x128xf32, #tpu.memory_space<vmem>>) target_semaphore(%arg12 : memref<!tpu.dma_semaphore, #tpu.memory_space<semaphore_mem>>)
      %c0_90 = arith.constant 0 : index
      %c0_91 = arith.constant 0 : index
      %290 = vector.load %arg3[%c0_90, %c0_91] : memref<2x32xf32, #tpu.memory_space<vmem>>, vector<2x32xf32>
      %c0_92 = arith.constant 0 : index
      %c0_93 = arith.constant 0 : index
      %291 = vector.load %arg9[%c0_92, %c0_93] : memref<2x32xf32, #tpu.memory_space<vmem>>, vector<2x32xf32>
      tpu.vector_store %arg9[%c0_92, %c0_93], %290 {strides = array<i32>} : memref<2x32xf32, #tpu.memory_space<vmem>>, vector<2x32xf32>,
      %c0_94 = arith.constant 0 : index
      %c0_95 = arith.constant 0 : index
      %292 = vector.load %arg4[%c0_94, %c0_95] : memref<2x32xf32, #tpu.memory_space<vmem>>, vector<2x32xf32>
      %c0_96 = arith.constant 0 : index
      %c0_97 = arith.constant 0 : index
      %293 = vector.load %arg10[%c0_96, %c0_97] : memref<2x32xf32, #tpu.memory_space<vmem>>, vector<2x32xf32>
      tpu.vector_store %arg10[%c0_96, %c0_97], %292 {strides = array<i32>} : memref<2x32xf32, #tpu.memory_space<vmem>>, vector<2x32xf32>,
      tpu.wait_dma2 semaphore(%arg12 : memref<!tpu.dma_semaphore, #tpu.memory_space<semaphore_mem>>) src(%arg5 : memref<32x128xf32, #tpu.memory_space<any>>) dst(%arg11 : memref<32x128xf32, #tpu.memory_space<vmem>>)
    } else {
    }
    %c0 = arith.constant 0 : index
    %c0_1 = arith.constant 0 : index
    %3 = vector.load %arg9[%c0, %c0_1] : memref<2x32xf32, #tpu.memory_space<vmem>>, vector<2x32xf32>
    %c0_2 = arith.constant 0 : index
    %c0_3 = arith.constant 0 : index
    %4 = vector.load %arg10[%c0_2, %c0_3] : memref<2x32xf32, #tpu.memory_space<vmem>>, vector<2x32xf32>
    %c0_i32_4 = arith.constant 0 : i32
    %5 = arith.index_cast %c0_i32_4 : i32 to index
    %c0_5 = arith.constant 0 : index
    %c0_6 = arith.constant 0 : index
    %6 = vector.load %arg2[%5, %c0_5, %c0_6] : memref<8x2x128xf32, #tpu.memory_space<vmem>>, vector<1x2x128xf32>
    %7 = vector.shape_cast %6 : vector<1x2x128xf32> to vector<2x128xf32>
    %c0_7 = arith.constant 0 : index
    %c0_8 = arith.constant 0 : index
    %8 = vector.load %arg11[%c0_7, %c0_8] : memref<32x128xf32, #tpu.memory_space<vmem>>, vector<32x128xf32>
    %cst = arith.constant dense<0.000000e+00> : vector<2x128xf32>
    %9 = tpu.matmul %3, %8, %cst {dimension_numbers = #tpu.dot_dimension_numbers<[1], [0], [0], [1], [0, 0, 1, 1], [], []>} : vector<2x32xf32>, vector<32x128xf32>, vector<2x128xf32> -> vector<2x128xf32>
    %10 = arith.addf %7, %9 : vector<2x128xf32>
    %11 = vector.extract_strided_slice %10 {offsets = [0, 0], sizes = [2, 32], strides = [1, 1]} : vector<2x128xf32> to vector<2x32xf32>
    %12 = arith.negf %11 : vector<2x32xf32>
    %13 = math.exp %12 : vector<2x32xf32>
    %cst_9 = arith.constant 1.000000e+00 : f32
    %14 = vector.broadcast %cst_9 : f32 to vector<2x32xf32>
    %15 = arith.addf %14, %13 : vector<2x32xf32>
    %16 = arith.divf %14, %15 : vector<2x32xf32>
    %17 = vector.extract_strided_slice %10 {offsets = [0, 32], sizes = [2, 32], strides = [1, 1]} : vector<2x128xf32> to vector<2x32xf32>
    %18 = arith.negf %17 : vector<2x32xf32>
    %19 = math.exp %18 : vector<2x32xf32>
    %cst_10 = arith.constant 1.000000e+00 : f32
    %20 = vector.broadcast %cst_10 : f32 to vector<2x32xf32>
    %21 = arith.addf %20, %19 : vector<2x32xf32>
    %22 = arith.divf %20, %21 : vector<2x32xf32>
    %23 = vector.extract_strided_slice %10 {offsets = [0, 64], sizes = [2, 32], strides = [1, 1]} : vector<2x128xf32> to vector<2x32xf32>
    %24 = math.tanh %23 : vector<2x32xf32>
    %25 = vector.extract_strided_slice %10 {offsets = [0, 96], sizes = [2, 32], strides = [1, 1]} : vector<2x128xf32> to vector<2x32xf32>
    %26 = arith.negf %25 : vector<2x32xf32>
    %27 = math.exp %26 : vector<2x32xf32>
    %cst_11 = arith.constant 1.000000e+00 : f32
    %28 = vector.broadcast %cst_11 : f32 to vector<2x32xf32>
    %29 = arith.addf %28, %27 : vector<2x32xf32>
    %30 = arith.divf %28, %29 : vector<2x32xf32>
    %31 = arith.mulf %22, %4 : vector<2x32xf32>
    %32 = arith.mulf %16, %24 : vector<2x32xf32>
    %33 = arith.addf %31, %32 : vector<2x32xf32>
    %34 = math.tanh %33 : vector<2x32xf32>
    %35 = arith.mulf %30, %34 : vector<2x32xf32>
    %36 = arith.index_cast %c0_i32_4 : i32 to index
    %c0_12 = arith.constant 0 : index
    %c0_13 = arith.constant 0 : index
    %37 = vector.load %arg6[%36, %c0_12, %c0_13] : memref<8x2x32xf32, #tpu.memory_space<vmem>>, vector<1x2x32xf32>
    %38 = vector.shape_cast %37 : vector<1x2x32xf32> to vector<2x32xf32>
    %39 = vector.shape_cast %35 : vector<2x32xf32> to vector<1x2x32xf32>
    tpu.vector_store %arg6[%36, %c0_12, %c0_13], %39 {strides = array<i32>} : memref<8x2x32xf32, #tpu.memory_space<vmem>>, vector<1x2x32xf32>,
    %c1_i32 = arith.constant 1 : i32
    %40 = arith.index_cast %c1_i32 : i32 to index
    %c0_14 = arith.constant 0 : index
    %c0_15 = arith.constant 0 : index
    %41 = vector.load %arg2[%40, %c0_14, %c0_15] : memref<8x2x128xf32, #tpu.memory_space<vmem>>, vector<1x2x128xf32>
    %42 = vector.shape_cast %41 : vector<1x2x128xf32> to vector<2x128xf32>
    %c0_16 = arith.constant 0 : index
    %c0_17 = arith.constant 0 : index
    %43 = vector.load %arg11[%c0_16, %c0_17] : memref<32x128xf32, #tpu.memory_space<vmem>>, vector<32x128xf32>
    %cst_18 = arith.constant dense<0.000000e+00> : vector<2x128xf32>
    %44 = tpu.matmul %35, %43, %cst_18 {dimension_numbers = #tpu.dot_dimension_numbers<[1], [0], [0], [1], [0, 0, 1, 1], [], []>} : vector<2x32xf32>, vector<32x128xf32>, vector<2x128xf32> -> vector<2x128xf32>
    %45 = arith.addf %42, %44 : vector<2x128xf32>
    %46 = vector.extract_strided_slice %45 {offsets = [0, 0], sizes = [2, 32], strides = [1, 1]} : vector<2x128xf32> to vector<2x32xf32>
    %47 = arith.negf %46 : vector<2x32xf32>
    %48 = math.exp %47 : vector<2x32xf32>
    %cst_19 = arith.constant 1.000000e+00 : f32
    %49 = vector.broadcast %cst_19 : f32 to vector<2x32xf32>
    %50 = arith.addf %49, %48 : vector<2x32xf32>
    %51 = arith.divf %49, %50 : vector<2x32xf32>
    %52 = vector.extract_strided_slice %45 {offsets = [0, 32], sizes = [2, 32], strides = [1, 1]} : vector<2x128xf32> to vector<2x32xf32>
    %53 = arith.negf %52 : vector<2x32xf32>
    %54 = math.exp %53 : vector<2x32xf32>
    %cst_20 = arith.constant 1.000000e+00 : f32
    %55 = vector.broadcast %cst_20 : f32 to vector<2x32xf32>
    %56 = arith.addf %55, %54 : vector<2x32xf32>
    %57 = arith.divf %55, %56 : vector<2x32xf32>
    %58 = vector.extract_strided_slice %45 {offsets = [0, 64], sizes = [2, 32], strides = [1, 1]} : vector<2x128xf32> to vector<2x32xf32>
    %59 = math.tanh %58 : vector<2x32xf32>
    %60 = vector.extract_strided_slice %45 {offsets = [0, 96], sizes = [2, 32], strides = [1, 1]} : vector<2x128xf32> to vector<2x32xf32>
    %61 = arith.negf %60 : vector<2x32xf32>
    %62 = math.exp %61 : vector<2x32xf32>
    %cst_21 = arith.constant 1.000000e+00 : f32
    %63 = vector.broadcast %cst_21 : f32 to vector<2x32xf32>
    %64 = arith.addf %63, %62 : vector<2x32xf32>
    %65 = arith.divf %63, %64 : vector<2x32xf32>
    %66 = arith.mulf %57, %33 : vector<2x32xf32>
    %67 = arith.mulf %51, %59 : vector<2x32xf32>
    %68 = arith.addf %66, %67 : vector<2x32xf32>
    %69 = math.tanh %68 : vector<2x32xf32>
    %70 = arith.mulf %65, %69 : vector<2x32xf32>
    %71 = arith.index_cast %c1_i32 : i32 to index
    %c0_22 = arith.constant 0 : index
    %c0_23 = arith.constant 0 : index
    %72 = vector.load %arg6[%71, %c0_22, %c0_23] : memref<8x2x32xf32, #tpu.memory_space<vmem>>, vector<1x2x32xf32>
    %73 = vector.shape_cast %72 : vector<1x2x32xf32> to vector<2x32xf32>
    %74 = vector.shape_cast %70 : vector<2x32xf32> to vector<1x2x32xf32>
    tpu.vector_store %arg6[%71, %c0_22, %c0_23], %74 {strides = array<i32>} : memref<8x2x32xf32, #tpu.memory_space<vmem>>, vector<1x2x32xf32>,
    %c2_i32 = arith.constant 2 : i32
    %75 = arith.index_cast %c2_i32 : i32 to index
    %c0_24 = arith.constant 0 : index
    %c0_25 = arith.constant 0 : index
    %76 = vector.load %arg2[%75, %c0_24, %c0_25] : memref<8x2x128xf32, #tpu.memory_space<vmem>>, vector<1x2x128xf32>
    %77 = vector.shape_cast %76 : vector<1x2x128xf32> to vector<2x128xf32>
    %c0_26 = arith.constant 0 : index
    %c0_27 = arith.constant 0 : index
    %78 = vector.load %arg11[%c0_26, %c0_27] : memref<32x128xf32, #tpu.memory_space<vmem>>, vector<32x128xf32>
    %cst_28 = arith.constant dense<0.000000e+00> : vector<2x128xf32>
    %79 = tpu.matmul %70, %78, %cst_28 {dimension_numbers = #tpu.dot_dimension_numbers<[1], [0], [0], [1], [0, 0, 1, 1], [], []>} : vector<2x32xf32>, vector<32x128xf32>, vector<2x128xf32> -> vector<2x128xf32>
    %80 = arith.addf %77, %79 : vector<2x128xf32>
    %81 = vector.extract_strided_slice %80 {offsets = [0, 0], sizes = [2, 32], strides = [1, 1]} : vector<2x128xf32> to vector<2x32xf32>
    %82 = arith.negf %81 : vector<2x32xf32>
    %83 = math.exp %82 : vector<2x32xf32>
    %cst_29 = arith.constant 1.000000e+00 : f32
    %84 = vector.broadcast %cst_29 : f32 to vector<2x32xf32>
    %85 = arith.addf %84, %83 : vector<2x32xf32>
    %86 = arith.divf %84, %85 : vector<2x32xf32>
    %87 = vector.extract_strided_slice %80 {offsets = [0, 32], sizes = [2, 32], strides = [1, 1]} : vector<2x128xf32> to vector<2x32xf32>
    %88 = arith.negf %87 : vector<2x32xf32>
    %89 = math.exp %88 : vector<2x32xf32>
    %cst_30 = arith.constant 1.000000e+00 : f32
    %90 = vector.broadcast %cst_30 : f32 to vector<2x32xf32>
    %91 = arith.addf %90, %89 : vector<2x32xf32>
    %92 = arith.divf %90, %91 : vector<2x32xf32>
    %93 = vector.extract_strided_slice %80 {offsets = [0, 64], sizes = [2, 32], strides = [1, 1]} : vector<2x128xf32> to vector<2x32xf32>
    %94 = math.tanh %93 : vector<2x32xf32>
    %95 = vector.extract_strided_slice %80 {offsets = [0, 96], sizes = [2, 32], strides = [1, 1]} : vector<2x128xf32> to vector<2x32xf32>
    %96 = arith.negf %95 : vector<2x32xf32>
    %97 = math.exp %96 : vector<2x32xf32>
    %cst_31 = arith.constant 1.000000e+00 : f32
    %98 = vector.broadcast %cst_31 : f32 to vector<2x32xf32>
    %99 = arith.addf %98, %97 : vector<2x32xf32>
    %100 = arith.divf %98, %99 : vector<2x32xf32>
    %101 = arith.mulf %92, %68 : vector<2x32xf32>
    %102 = arith.mulf %86, %94 : vector<2x32xf32>
    %103 = arith.addf %101, %102 : vector<2x32xf32>
    %104 = math.tanh %103 : vector<2x32xf32>
    %105 = arith.mulf %100, %104 : vector<2x32xf32>
    %106 = arith.index_cast %c2_i32 : i32 to index
    %c0_32 = arith.constant 0 : index
    %c0_33 = arith.constant 0 : index
    %107 = vector.load %arg6[%106, %c0_32, %c0_33] : memref<8x2x32xf32, #tpu.memory_space<vmem>>, vector<1x2x32xf32>
    %108 = vector.shape_cast %107 : vector<1x2x32xf32> to vector<2x32xf32>
    %109 = vector.shape_cast %105 : vector<2x32xf32> to vector<1x2x32xf32>
    tpu.vector_store %arg6[%106, %c0_32, %c0_33], %109 {strides = array<i32>} : memref<8x2x32xf32, #tpu.memory_space<vmem>>, vector<1x2x32xf32>,
    %c3_i32 = arith.constant 3 : i32
    %110 = arith.index_cast %c3_i32 : i32 to index
    %c0_34 = arith.constant 0 : index
    %c0_35 = arith.constant 0 : index
    %111 = vector.load %arg2[%110, %c0_34, %c0_35] : memref<8x2x128xf32, #tpu.memory_space<vmem>>, vector<1x2x128xf32>
    %112 = vector.shape_cast %111 : vector<1x2x128xf32> to vector<2x128xf32>
    %c0_36 = arith.constant 0 : index
    %c0_37 = arith.constant 0 : index
    %113 = vector.load %arg11[%c0_36, %c0_37] : memref<32x128xf32, #tpu.memory_space<vmem>>, vector<32x128xf32>
    %cst_38 = arith.constant dense<0.000000e+00> : vector<2x128xf32>
    %114 = tpu.matmul %105, %113, %cst_38 {dimension_numbers = #tpu.dot_dimension_numbers<[1], [0], [0], [1], [0, 0, 1, 1], [], []>} : vector<2x32xf32>, vector<32x128xf32>, vector<2x128xf32> -> vector<2x128xf32>
    %115 = arith.addf %112, %114 : vector<2x128xf32>
    %116 = vector.extract_strided_slice %115 {offsets = [0, 0], sizes = [2, 32], strides = [1, 1]} : vector<2x128xf32> to vector<2x32xf32>
    %117 = arith.negf %116 : vector<2x32xf32>
    %118 = math.exp %117 : vector<2x32xf32>
    %cst_39 = arith.constant 1.000000e+00 : f32
    %119 = vector.broadcast %cst_39 : f32 to vector<2x32xf32>
    %120 = arith.addf %119, %118 : vector<2x32xf32>
    %121 = arith.divf %119, %120 : vector<2x32xf32>
    %122 = vector.extract_strided_slice %115 {offsets = [0, 32], sizes = [2, 32], strides = [1, 1]} : vector<2x128xf32> to vector<2x32xf32>
    %123 = arith.negf %122 : vector<2x32xf32>
    %124 = math.exp %123 : vector<2x32xf32>
    %cst_40 = arith.constant 1.000000e+00 : f32
    %125 = vector.broadcast %cst_40 : f32 to vector<2x32xf32>
    %126 = arith.addf %125, %124 : vector<2x32xf32>
    %127 = arith.divf %125, %126 : vector<2x32xf32>
    %128 = vector.extract_strided_slice %115 {offsets = [0, 64], sizes = [2, 32], strides = [1, 1]} : vector<2x128xf32> to vector<2x32xf32>
    %129 = math.tanh %128 : vector<2x32xf32>
    %130 = vector.extract_strided_slice %115 {offsets = [0, 96], sizes = [2, 32], strides = [1, 1]} : vector<2x128xf32> to vector<2x32xf32>
    %131 = arith.negf %130 : vector<2x32xf32>
    %132 = math.exp %131 : vector<2x32xf32>
    %cst_41 = arith.constant 1.000000e+00 : f32
    %133 = vector.broadcast %cst_41 : f32 to vector<2x32xf32>
    %134 = arith.addf %133, %132 : vector<2x32xf32>
    %135 = arith.divf %133, %134 : vector<2x32xf32>
    %136 = arith.mulf %127, %103 : vector<2x32xf32>
    %137 = arith.mulf %121, %129 : vector<2x32xf32>
    %138 = arith.addf %136, %137 : vector<2x32xf32>
    %139 = math.tanh %138 : vector<2x32xf32>
    %140 = arith.mulf %135, %139 : vector<2x32xf32>
    %141 = arith.index_cast %c3_i32 : i32 to index
    %c0_42 = arith.constant 0 : index
    %c0_43 = arith.constant 0 : index
    %142 = vector.load %arg6[%141, %c0_42, %c0_43] : memref<8x2x32xf32, #tpu.memory_space<vmem>>, vector<1x2x32xf32>
    %143 = vector.shape_cast %142 : vector<1x2x32xf32> to vector<2x32xf32>
    %144 = vector.shape_cast %140 : vector<2x32xf32> to vector<1x2x32xf32>
    tpu.vector_store %arg6[%141, %c0_42, %c0_43], %144 {strides = array<i32>} : memref<8x2x32xf32, #tpu.memory_space<vmem>>, vector<1x2x32xf32>,
    %c4_i32 = arith.constant 4 : i32
    %145 = arith.index_cast %c4_i32 : i32 to index
    %c0_44 = arith.constant 0 : index
    %c0_45 = arith.constant 0 : index
    %146 = vector.load %arg2[%145, %c0_44, %c0_45] : memref<8x2x128xf32, #tpu.memory_space<vmem>>, vector<1x2x128xf32>
    %147 = vector.shape_cast %146 : vector<1x2x128xf32> to vector<2x128xf32>
    %c0_46 = arith.constant 0 : index
    %c0_47 = arith.constant 0 : index
    %148 = vector.load %arg11[%c0_46, %c0_47] : memref<32x128xf32, #tpu.memory_space<vmem>>, vector<32x128xf32>
    %cst_48 = arith.constant dense<0.000000e+00> : vector<2x128xf32>
    %149 = tpu.matmul %140, %148, %cst_48 {dimension_numbers = #tpu.dot_dimension_numbers<[1], [0], [0], [1], [0, 0, 1, 1], [], []>} : vector<2x32xf32>, vector<32x128xf32>, vector<2x128xf32> -> vector<2x128xf32>
    %150 = arith.addf %147, %149 : vector<2x128xf32>
    %151 = vector.extract_strided_slice %150 {offsets = [0, 0], sizes = [2, 32], strides = [1, 1]} : vector<2x128xf32> to vector<2x32xf32>
    %152 = arith.negf %151 : vector<2x32xf32>
    %153 = math.exp %152 : vector<2x32xf32>
    %cst_49 = arith.constant 1.000000e+00 : f32
    %154 = vector.broadcast %cst_49 : f32 to vector<2x32xf32>
    %155 = arith.addf %154, %153 : vector<2x32xf32>
    %156 = arith.divf %154, %155 : vector<2x32xf32>
    %157 = vector.extract_strided_slice %150 {offsets = [0, 32], sizes = [2, 32], strides = [1, 1]} : vector<2x128xf32> to vector<2x32xf32>
    %158 = arith.negf %157 : vector<2x32xf32>
    %159 = math.exp %158 : vector<2x32xf32>
    %cst_50 = arith.constant 1.000000e+00 : f32
    %160 = vector.broadcast %cst_50 : f32 to vector<2x32xf32>
    %161 = arith.addf %160, %159 : vector<2x32xf32>
    %162 = arith.divf %160, %161 : vector<2x32xf32>
    %163 = vector.extract_strided_slice %150 {offsets = [0, 64], sizes = [2, 32], strides = [1, 1]} : vector<2x128xf32> to vector<2x32xf32>
    %164 = math.tanh %163 : vector<2x32xf32>
    %165 = vector.extract_strided_slice %150 {offsets = [0, 96], sizes = [2, 32], strides = [1, 1]} : vector<2x128xf32> to vector<2x32xf32>
    %166 = arith.negf %165 : vector<2x32xf32>
    %167 = math.exp %166 : vector<2x32xf32>
    %cst_51 = arith.constant 1.000000e+00 : f32
    %168 = vector.broadcast %cst_51 : f32 to vector<2x32xf32>
    %169 = arith.addf %168, %167 : vector<2x32xf32>
    %170 = arith.divf %168, %169 : vector<2x32xf32>
    %171 = arith.mulf %162, %138 : vector<2x32xf32>
    %172 = arith.mulf %156, %164 : vector<2x32xf32>
    %173 = arith.addf %171, %172 : vector<2x32xf32>
    %174 = math.tanh %173 : vector<2x32xf32>
    %175 = arith.mulf %170, %174 : vector<2x32xf32>
    %176 = arith.index_cast %c4_i32 : i32 to index
    %c0_52 = arith.constant 0 : index
    %c0_53 = arith.constant 0 : index
    %177 = vector.load %arg6[%176, %c0_52, %c0_53] : memref<8x2x32xf32, #tpu.memory_space<vmem>>, vector<1x2x32xf32>
    %178 = vector.shape_cast %177 : vector<1x2x32xf32> to vector<2x32xf32>
    %179 = vector.shape_cast %175 : vector<2x32xf32> to vector<1x2x32xf32>
    tpu.vector_store %arg6[%176, %c0_52, %c0_53], %179 {strides = array<i32>} : memref<8x2x32xf32, #tpu.memory_space<vmem>>, vector<1x2x32xf32>,
    %c5_i32 = arith.constant 5 : i32
    %180 = arith.index_cast %c5_i32 : i32 to index
    %c0_54 = arith.constant 0 : index
    %c0_55 = arith.constant 0 : index
    %181 = vector.load %arg2[%180, %c0_54, %c0_55] : memref<8x2x128xf32, #tpu.memory_space<vmem>>, vector<1x2x128xf32>
    %182 = vector.shape_cast %181 : vector<1x2x128xf32> to vector<2x128xf32>
    %c0_56 = arith.constant 0 : index
    %c0_57 = arith.constant 0 : index
    %183 = vector.load %arg11[%c0_56, %c0_57] : memref<32x128xf32, #tpu.memory_space<vmem>>, vector<32x128xf32>
    %cst_58 = arith.constant dense<0.000000e+00> : vector<2x128xf32>
    %184 = tpu.matmul %175, %183, %cst_58 {dimension_numbers = #tpu.dot_dimension_numbers<[1], [0], [0], [1], [0, 0, 1, 1], [], []>} : vector<2x32xf32>, vector<32x128xf32>, vector<2x128xf32> -> vector<2x128xf32>
    %185 = arith.addf %182, %184 : vector<2x128xf32>
    %186 = vector.extract_strided_slice %185 {offsets = [0, 0], sizes = [2, 32], strides = [1, 1]} : vector<2x128xf32> to vector<2x32xf32>
    %187 = arith.negf %186 : vector<2x32xf32>
    %188 = math.exp %187 : vector<2x32xf32>
    %cst_59 = arith.constant 1.000000e+00 : f32
    %189 = vector.broadcast %cst_59 : f32 to vector<2x32xf32>
    %190 = arith.addf %189, %188 : vector<2x32xf32>
    %191 = arith.divf %189, %190 : vector<2x32xf32>
    %192 = vector.extract_strided_slice %185 {offsets = [0, 32], sizes = [2, 32], strides = [1, 1]} : vector<2x128xf32> to vector<2x32xf32>
    %193 = arith.negf %192 : vector<2x32xf32>
    %194 = math.exp %193 : vector<2x32xf32>
    %cst_60 = arith.constant 1.000000e+00 : f32
    %195 = vector.broadcast %cst_60 : f32 to vector<2x32xf32>
    %196 = arith.addf %195, %194 : vector<2x32xf32>
    %197 = arith.divf %195, %196 : vector<2x32xf32>
    %198 = vector.extract_strided_slice %185 {offsets = [0, 64], sizes = [2, 32], strides = [1, 1]} : vector<2x128xf32> to vector<2x32xf32>
    %199 = math.tanh %198 : vector<2x32xf32>
    %200 = vector.extract_strided_slice %185 {offsets = [0, 96], sizes = [2, 32], strides = [1, 1]} : vector<2x128xf32> to vector<2x32xf32>
    %201 = arith.negf %200 : vector<2x32xf32>
    %202 = math.exp %201 : vector<2x32xf32>
    %cst_61 = arith.constant 1.000000e+00 : f32
    %203 = vector.broadcast %cst_61 : f32 to vector<2x32xf32>
    %204 = arith.addf %203, %202 : vector<2x32xf32>
    %205 = arith.divf %203, %204 : vector<2x32xf32>
    %206 = arith.mulf %197, %173 : vector<2x32xf32>
    %207 = arith.mulf %191, %199 : vector<2x32xf32>
    %208 = arith.addf %206, %207 : vector<2x32xf32>
    %209 = math.tanh %208 : vector<2x32xf32>
    %210 = arith.mulf %205, %209 : vector<2x32xf32>
    %211 = arith.index_cast %c5_i32 : i32 to index
    %c0_62 = arith.constant 0 : index
    %c0_63 = arith.constant 0 : index
    %212 = vector.load %arg6[%211, %c0_62, %c0_63] : memref<8x2x32xf32, #tpu.memory_space<vmem>>, vector<1x2x32xf32>
    %213 = vector.shape_cast %212 : vector<1x2x32xf32> to vector<2x32xf32>
    %214 = vector.shape_cast %210 : vector<2x32xf32> to vector<1x2x32xf32>
    tpu.vector_store %arg6[%211, %c0_62, %c0_63], %214 {strides = array<i32>} : memref<8x2x32xf32, #tpu.memory_space<vmem>>, vector<1x2x32xf32>,
    %c6_i32 = arith.constant 6 : i32
    %215 = arith.index_cast %c6_i32 : i32 to index
    %c0_64 = arith.constant 0 : index
    %c0_65 = arith.constant 0 : index
    %216 = vector.load %arg2[%215, %c0_64, %c0_65] : memref<8x2x128xf32, #tpu.memory_space<vmem>>, vector<1x2x128xf32>
    %217 = vector.shape_cast %216 : vector<1x2x128xf32> to vector<2x128xf32>
    %c0_66 = arith.constant 0 : index
    %c0_67 = arith.constant 0 : index
    %218 = vector.load %arg11[%c0_66, %c0_67] : memref<32x128xf32, #tpu.memory_space<vmem>>, vector<32x128xf32>
    %cst_68 = arith.constant dense<0.000000e+00> : vector<2x128xf32>
    %219 = tpu.matmul %210, %218, %cst_68 {dimension_numbers = #tpu.dot_dimension_numbers<[1], [0], [0], [1], [0, 0, 1, 1], [], []>} : vector<2x32xf32>, vector<32x128xf32>, vector<2x128xf32> -> vector<2x128xf32>
    %220 = arith.addf %217, %219 : vector<2x128xf32>
    %221 = vector.extract_strided_slice %220 {offsets = [0, 0], sizes = [2, 32], strides = [1, 1]} : vector<2x128xf32> to vector<2x32xf32>
    %222 = arith.negf %221 : vector<2x32xf32>
    %223 = math.exp %222 : vector<2x32xf32>
    %cst_69 = arith.constant 1.000000e+00 : f32
    %224 = vector.broadcast %cst_69 : f32 to vector<2x32xf32>
    %225 = arith.addf %224, %223 : vector<2x32xf32>
    %226 = arith.divf %224, %225 : vector<2x32xf32>
    %227 = vector.extract_strided_slice %220 {offsets = [0, 32], sizes = [2, 32], strides = [1, 1]} : vector<2x128xf32> to vector<2x32xf32>
    %228 = arith.negf %227 : vector<2x32xf32>
    %229 = math.exp %228 : vector<2x32xf32>
    %cst_70 = arith.constant 1.000000e+00 : f32
    %230 = vector.broadcast %cst_70 : f32 to vector<2x32xf32>
    %231 = arith.addf %230, %229 : vector<2x32xf32>
    %232 = arith.divf %230, %231 : vector<2x32xf32>
    %233 = vector.extract_strided_slice %220 {offsets = [0, 64], sizes = [2, 32], strides = [1, 1]} : vector<2x128xf32> to vector<2x32xf32>
    %234 = math.tanh %233 : vector<2x32xf32>
    %235 = vector.extract_strided_slice %220 {offsets = [0, 96], sizes = [2, 32], strides = [1, 1]} : vector<2x128xf32> to vector<2x32xf32>
    %236 = arith.negf %235 : vector<2x32xf32>
    %237 = math.exp %236 : vector<2x32xf32>
    %cst_71 = arith.constant 1.000000e+00 : f32
    %238 = vector.broadcast %cst_71 : f32 to vector<2x32xf32>
    %239 = arith.addf %238, %237 : vector<2x32xf32>
    %240 = arith.divf %238, %239 : vector<2x32xf32>
    %241 = arith.mulf %232, %208 : vector<2x32xf32>
    %242 = arith.mulf %226, %234 : vector<2x32xf32>
    %243 = arith.addf %241, %242 : vector<2x32xf32>
    %244 = math.tanh %243 : vector<2x32xf32>
    %245 = arith.mulf %240, %244 : vector<2x32xf32>
    %246 = arith.index_cast %c6_i32 : i32 to index
    %c0_72 = arith.constant 0 : index
    %c0_73 = arith.constant 0 : index
    %247 = vector.load %arg6[%246, %c0_72, %c0_73] : memref<8x2x32xf32, #tpu.memory_space<vmem>>, vector<1x2x32xf32>
    %248 = vector.shape_cast %247 : vector<1x2x32xf32> to vector<2x32xf32>
    %249 = vector.shape_cast %245 : vector<2x32xf32> to vector<1x2x32xf32>
    tpu.vector_store %arg6[%246, %c0_72, %c0_73], %249 {strides = array<i32>} : memref<8x2x32xf32, #tpu.memory_space<vmem>>, vector<1x2x32xf32>,
    %c7_i32 = arith.constant 7 : i32
    %250 = arith.index_cast %c7_i32 : i32 to index
    %c0_74 = arith.constant 0 : index
    %c0_75 = arith.constant 0 : index
    %251 = vector.load %arg2[%250, %c0_74, %c0_75] : memref<8x2x128xf32, #tpu.memory_space<vmem>>, vector<1x2x128xf32>
    %252 = vector.shape_cast %251 : vector<1x2x128xf32> to vector<2x128xf32>
    %c0_76 = arith.constant 0 : index
    %c0_77 = arith.constant 0 : index
    %253 = vector.load %arg11[%c0_76, %c0_77] : memref<32x128xf32, #tpu.memory_space<vmem>>, vector<32x128xf32>
    %cst_78 = arith.constant dense<0.000000e+00> : vector<2x128xf32>
    %254 = tpu.matmul %245, %253, %cst_78 {dimension_numbers = #tpu.dot_dimension_numbers<[1], [0], [0], [1], [0, 0, 1, 1], [], []>} : vector<2x32xf32>, vector<32x128xf32>, vector<2x128xf32> -> vector<2x128xf32>
    %255 = arith.addf %252, %254 : vector<2x128xf32>
    %256 = vector.extract_strided_slice %255 {offsets = [0, 0], sizes = [2, 32], strides = [1, 1]} : vector<2x128xf32> to vector<2x32xf32>
    %257 = arith.negf %256 : vector<2x32xf32>
    %258 = math.exp %257 : vector<2x32xf32>
    %cst_79 = arith.constant 1.000000e+00 : f32
    %259 = vector.broadcast %cst_79 : f32 to vector<2x32xf32>
    %260 = arith.addf %259, %258 : vector<2x32xf32>
    %261 = arith.divf %259, %260 : vector<2x32xf32>
    %262 = vector.extract_strided_slice %255 {offsets = [0, 32], sizes = [2, 32], strides = [1, 1]} : vector<2x128xf32> to vector<2x32xf32>
    %263 = arith.negf %262 : vector<2x32xf32>
    %264 = math.exp %263 : vector<2x32xf32>
    %cst_80 = arith.constant 1.000000e+00 : f32
    %265 = vector.broadcast %cst_80 : f32 to vector<2x32xf32>
    %266 = arith.addf %265, %264 : vector<2x32xf32>
    %267 = arith.divf %265, %266 : vector<2x32xf32>
    %268 = vector.extract_strided_slice %255 {offsets = [0, 64], sizes = [2, 32], strides = [1, 1]} : vector<2x128xf32> to vector<2x32xf32>
    %269 = math.tanh %268 : vector<2x32xf32>
    %270 = vector.extract_strided_slice %255 {offsets = [0, 96], sizes = [2, 32], strides = [1, 1]} : vector<2x128xf32> to vector<2x32xf32>
    %271 = arith.negf %270 : vector<2x32xf32>
    %272 = math.exp %271 : vector<2x32xf32>
    %cst_81 = arith.constant 1.000000e+00 : f32
    %273 = vector.broadcast %cst_81 : f32 to vector<2x32xf32>
    %274 = arith.addf %273, %272 : vector<2x32xf32>
    %275 = arith.divf %273, %274 : vector<2x32xf32>
    %276 = arith.mulf %267, %243 : vector<2x32xf32>
    %277 = arith.mulf %261, %269 : vector<2x32xf32>
    %278 = arith.addf %276, %277 : vector<2x32xf32>
    %279 = math.tanh %278 : vector<2x32xf32>
    %280 = arith.mulf %275, %279 : vector<2x32xf32>
    %281 = arith.index_cast %c7_i32 : i32 to index
    %c0_82 = arith.constant 0 : index
    %c0_83 = arith.constant 0 : index
    %282 = vector.load %arg6[%281, %c0_82, %c0_83] : memref<8x2x32xf32, #tpu.memory_space<vmem>>, vector<1x2x32xf32>
    %283 = vector.shape_cast %282 : vector<1x2x32xf32> to vector<2x32xf32>
    %284 = vector.shape_cast %280 : vector<2x32xf32> to vector<1x2x32xf32>
    tpu.vector_store %arg6[%281, %c0_82, %c0_83], %284 {strides = array<i32>} : memref<8x2x32xf32, #tpu.memory_space<vmem>>, vector<1x2x32xf32>,
    %c8_i32 = arith.constant 8 : i32
    %c0_84 = arith.constant 0 : index
    %c0_85 = arith.constant 0 : index
    %285 = vector.load %arg9[%c0_84, %c0_85] : memref<2x32xf32, #tpu.memory_space<vmem>>, vector<2x32xf32>
    tpu.vector_store %arg9[%c0_84, %c0_85], %280 {strides = array<i32>} : memref<2x32xf32, #tpu.memory_space<vmem>>, vector<2x32xf32>,
    %c0_86 = arith.constant 0 : index
    %c0_87 = arith.constant 0 : index
    %286 = vector.load %arg10[%c0_86, %c0_87] : memref<2x32xf32, #tpu.memory_space<vmem>>, vector<2x32xf32>
    tpu.vector_store %arg10[%c0_86, %c0_87], %278 {strides = array<i32>} : memref<2x32xf32, #tpu.memory_space<vmem>>, vector<2x32xf32>,
    %c0_i32_88 = arith.constant 0 : i32
    %287 = arith.cmpi eq, %arg1, %c0_i32_88 : i32
    %288 = arith.extui %287 : i1 to i32
    %c0_i32_89 = arith.constant 0 : i32
    %289 = arith.cmpi ne, %288, %c0_i32_89 : i32
    scf.if %289 {
      %c0_90 = arith.constant 0 : index
      %c0_91 = arith.constant 0 : index
      %290 = vector.load %arg7[%c0_90, %c0_91] : memref<2x32xf32, #tpu.memory_space<vmem>>, vector<2x32xf32>
      tpu.vector_store %arg7[%c0_90, %c0_91], %280 {strides = array<i32>} : memref<2x32xf32, #tpu.memory_space<vmem>>, vector<2x32xf32>,
      %c0_92 = arith.constant 0 : index
      %c0_93 = arith.constant 0 : index
      %291 = vector.load %arg8[%c0_92, %c0_93] : memref<2x32xf32, #tpu.memory_space<vmem>>, vector<2x32xf32>
      tpu.vector_store %arg8[%c0_92, %c0_93], %278 {strides = array<i32>} : memref<2x32xf32, #tpu.memory_space<vmem>>, vector<2x32xf32>,
    } else {
    }
    return
  }
  func.func @transform_0(%arg0: i32, %arg1: i32) -> (i32, i32, i32) {
    %c0_i32 = arith.constant 0 : i32
    %c0_i32_0 = arith.constant 0 : i32
    return %arg1, %arg0, %c0_i32 : i32, i32, i32
  }
  func.func @transform_1(%arg0: i32, %arg1: i32) -> (i32, i32) {
    %c0_i32 = arith.constant 0 : i32
    %c0_i32_0 = arith.constant 0 : i32
    return %arg0, %c0_i32 : i32, i32
  }
  func.func @transform_2(%arg0: i32, %arg1: i32) -> (i32, i32) {
    %c0_i32 = arith.constant 0 : i32
    %c0_i32_0 = arith.constant 0 : i32
    return %arg0, %c0_i32 : i32, i32
  }
  func.func @transform_4(%arg0: i32, %arg1: i32) -> (i32, i32, i32) {
    %c0_i32 = arith.constant 0 : i32
    %c0_i32_0 = arith.constant 0 : i32
    return %arg1, %arg0, %c0_i32 : i32, i32, i32
  }
  func.func @transform_5(%arg0: i32, %arg1: i32) -> (i32, i32) {
    %c0_i32 = arith.constant 0 : i32
    %c0_i32_0 = arith.constant 0 : i32
    return %arg0, %c0_i32 : i32, i32
  }
  func.func @transform_6(%arg0: i32, %arg1: i32) -> (i32, i32) {
    %c0_i32 = arith.constant 0 : i32
    %c0_i32_0 = arith.constant 0 : i32
    return %arg0, %c0_i32 : i32, i32
  }
}

</mosaic_0001>

<llo_original>
// kernel: tpu_custom_call.1
$region0: #{tpu_custom_call.1}
  #allocation0 [shape = 'u32[]', space=smem, size = 0x4, offset = 0x4, fixed_abs, tag = 'smem constant byte address 0x4 - core index']
  #allocation1 [shape = 'u32[72,128]{1,0:T(1,128)}', space=vmem, size = 0x9000, scoped, tag = 'internal scratch']
  #allocation2 [shape = 'f32[2,32]{1,0:T(2,128)}', space=vmem, size = 0x400, scoped, tag = 'scratch operand']
  #allocation3 [shape = 'f32[2,32]{1,0:T(2,128)}', space=vmem, size = 0x400, scoped, tag = 'scratch operand']
  #allocation4 [shape = 'f32[32,128]{1,0:T(8,128)}', space=vmem, size = 0x4000, scoped, tag = 'scratch operand']
  #allocation5 [shape = 's32[1]{0}', space=sflag, size = 0x4, scoped, tag = 'scratch operand']
  #allocation16 [shape = 's32[]', space=sflag, size = 0x4, offset = 0, fixed_abs, tag = 'sflag constant byte address 0x0 - dummy sync flag']
  #allocation17 [shape = 's32[]', space=sflag, size = 0x4, offset = 0, fixed_abs, tag = 'sflag constant byte address 0x0 - dummy sync flag']
  #allocation18 [shape = 'u32[]', space=smem, size = 0x4, offset = 0x44, fixed_abs, tag = 'smem constant byte address 0x44 - assertion arg 0']
  #allocation19 [shape = 'u32[]', space=smem, size = 0x4, offset = 0x48, fixed_abs, tag = 'smem constant byte address 0x48 - assertion arg 1']
  %s0 = inlined_call_operand.hbm [shape: f32[8,2,128], index: 0, kind: input, shape index: {}]
  %s1 = inlined_call_operand.hbm [shape: f32[2,32], index: 1, kind: input, shape index: {}]
  %s2 = inlined_call_operand.hbm [shape: f32[2,32], index: 2, kind: input, shape index: {}]
  %s3 = inlined_call_operand.hbm [shape: f32[32,128], index: 3, kind: input, shape index: {}]
  %s4 = inlined_call_operand.hbm [shape: f32[8,2,32], index: 4, kind: output, shape index: {0}]
  %s5 = inlined_call_operand.hbm [shape: f32[2,32], index: 5, kind: output, shape index: {1}]
  %s6 = inlined_call_operand.hbm [shape: f32[2,32], index: 6, kind: output, shape index: {2}]
  %7 = xla_tuple %s4, %s5, %s6
  %s8 = sld [smem:[#allocation0]]
  $region62: #{tpu_custom_call.1} parent=0
    _
  %s10 = ssub.s32 1, %s8
  %s11 = scalar_select 0, %s10, %s8
  $region1: #{tpu_custom_call.1} parent=0
    #allocation6 [shape = 'u8[8192]{0}', space=vmem, size = 0x2000, scoped, tag = 'input window, operand 0, single buffered']
    #allocation7 [shape = 's32[1]{0}', space=sflag, size = 0x4, scoped, tag = 'scoped memory for tpu_custom_call.1']
    #allocation8 [shape = 's32[1]{0}', space=sflag, size = 0x4, scoped, tag = 'scoped memory for tpu_custom_call.1']
    #allocation9 [shape = 'u8[1024]{0}', space=vmem, size = 0x400, scoped, tag = 'input window, operand 1, single buffered']
    #allocation10 [shape = 's32[1]{0}', space=sflag, size = 0x4, scoped, tag = 'scoped memory for tpu_custom_call.1']
    #allocation11 [shape = 'u8[1024]{0}', space=vmem, size = 0x400, scoped, tag = 'input window, operand 2, single buffered']
    #allocation12 [shape = 'u8[8192]{0}', space=vmem, size = 0x2000, scoped, tag = 'output window, operand 0, single buffered']
    #allocation13 [shape = 'u8[1024]{0}', space=vmem, size = 0x400, scoped, tag = 'output window, operand 1, single buffered']
    #allocation14 [shape = 's32[1]{0}', space=sflag, size = 0x4, scoped, tag = 'scoped memory for tpu_custom_call.1']
    #allocation15 [shape = 'u8[1024]{0}', space=vmem, size = 0x400, scoped, tag = 'output window, operand 2, single buffered']
    %12 = vsyncpa [#allocation7], 0
    %13 = vsyncpa [#allocation10], 0
    %14 = vsyncpa [#allocation8], 0
    %15 = vsyncpa [#allocation14], 0
    // Predicated region
    $region2: #{tpu_custom_call.1} parent=1 // pred_check
      _
    $region3: #{tpu_custom_call.1} parent=1 // pred_check_branch
      %17 = sbr.rel (0) target = $region5
    $region4: #{tpu_custom_call.1} parent=1 // pred_region
      %19 = vsyncadd [#allocation7], 0
      %s20 = sshll.u32 %s0, 4
      %s21 = int_to_ptr.hbm [resolvable:$true] %s20
      %s22 = sshll.u32 [#allocation6], 4
      %s23 = int_to_ptr.vmem [resolvable:$true] %s22
      %28 = dma.hbm_to_vmem [thread:$0]  %s21, 256, %s23, [#allocation7], 32, 32, 2
    $region5: #{tpu_custom_call.1} parent=1 // pred_fallthru
      _
    // Predicated region
    $region6: #{tpu_custom_call.1} parent=1 // pred_check
      _
    $region7: #{tpu_custom_call.1} parent=1 // pred_check_branch
      %30 = sbr.rel (0) target = $region9
    $region8: #{tpu_custom_call.1} parent=1 // pred_region
      %32 = vsyncadd [#allocation10], 0
      %s34 = sshll.u32 %s1, 4
      %s35 = int_to_ptr.hbm [resolvable:$true] %s34
      %s36 = sshll.u32 [#allocation9], 4
      %s37 = int_to_ptr.vmem [resolvable:$true] %s36
      %39 = dma.hbm_to_vmem [thread:$0]  %s35, 32, %s37, [#allocation10]
    $region9: #{tpu_custom_call.1} parent=1 // pred_fallthru
      _
    // Predicated region
    $region10: #{tpu_custom_call.1} parent=1 // pred_check
      _
    $region11: #{tpu_custom_call.1} parent=1 // pred_check_branch
      %41 = sbr.rel (0) target = $region13
    $region12: #{tpu_custom_call.1} parent=1 // pred_region
      %43 = vsyncadd [#allocation10], 0
      %s45 = sshll.u32 %s2, 4
      %s46 = int_to_ptr.hbm [resolvable:$true] %s45
      %s47 = sshll.u32 [#allocation11], 4
      %s48 = int_to_ptr.vmem [resolvable:$true] %s47
      %50 = dma.hbm_to_vmem [thread:$0]  %s46, 32, %s48, [#allocation10]
    $region13: #{tpu_custom_call.1} parent=1 // pred_fallthru
      _
    // Predicated region
    $region14: #{tpu_custom_call.1} parent=1 // pred_check
      _
    $region15: #{tpu_custom_call.1} parent=1 // pred_check_branch
      %52 = sbr.rel (0) target = $region17
    $region16: #{tpu_custom_call.1} parent=1 // pred_region
      %54 = dma.done [#allocation7], 256
    $region17: #{tpu_custom_call.1} parent=1 // pred_fallthru
      _
    // Predicated region
    $region18: #{tpu_custom_call.1} parent=1 // pred_check
      _
    $region19: #{tpu_custom_call.1} parent=1 // pred_check_branch
      %56 = sbr.rel (0) target = $region21
    $region20: #{tpu_custom_call.1} parent=1 // pred_region
      %58 = dma.done [#allocation10], 32
    $region21: #{tpu_custom_call.1} parent=1 // pred_fallthru
      _
    // Predicated region
    $region22: #{tpu_custom_call.1} parent=1 // pred_check
      _
    $region23: #{tpu_custom_call.1} parent=1 // pred_check_branch
      %60 = sbr.rel (0) target = $region25
    $region24: #{tpu_custom_call.1} parent=1 // pred_region
      %62 = dma.done [#allocation10], 32
    $region25: #{tpu_custom_call.1} parent=1 // pred_fallthru
      _
    %p63 = scmp.eq.s32.totalorder 0, 0
    // Predicated region
    $region26: #{tpu_custom_call.1} parent=1 // pred_check
      %p64 = pneg %p63
    $region27: #{tpu_custom_call.1} parent=1 // pred_check_branch
      %66 = sbr.rel (%p64) target = $region29
    $region28: #{tpu_custom_call.1} parent=1 // pred_region
      // Predicated region
      $region30: #{tpu_custom_call.1} parent=28 // pred_check
        _
      $region31: #{tpu_custom_call.1} parent=28 // pred_check_branch
        %68 = sbr.rel target = $region33
      $region32: #{tpu_custom_call.1} parent=28 // pred_region
        %69 = sst [smem:[#allocation18]] [#allocation17]
        %70 = sst [smem:[#allocation19]] [#allocation16]
      $region33: #{tpu_custom_call.1} parent=28 // pred_fallthru
        _
      %72 = shalt.err (0)
      %s74 = sshll.u32 %s3, 4
      %s75 = int_to_ptr.hbm [resolvable:$true] %s74
      %s76 = sshll.u32 [#allocation4], 4
      %s77 = int_to_ptr.vmem [resolvable:$true] %s76
      %79 = dma.hbm_to_vmem [thread:$0]  %s75, 512, %s77, [#allocation5]
      %v80 = vld [vmem:[#allocation9] sm:$0x3]
      %vm81 = vcmask 254976
      %82 = vst.msk [vmem:[#allocation2] sm:$0x3] %vm81, %v80
      %v83 = vld [vmem:[#allocation11] sm:$0x3]
      %84 = vst.msk [vmem:[#allocation3] sm:$0x3] %vm81, %v83
      %s85 = smul.u32 32, 1
      %s86 = sshll.u32 %s85, 4
      %87 = dma.done [#allocation5], %s86
    $region29: #{tpu_custom_call.1} parent=1 // pred_fallthru
      _
    %v88 = vld [vmem:[#allocation2] sm:$0x3]
    %v89 = vld [vmem:[#allocation3] sm:$0x3]
    %v90 = vld [vmem:[#allocation6] sm:$0x3]
    %v91 = vld [vmem:[#allocation4] sm:$0xff]
    %v92 = vld [vmem:[#allocation4 + $0x8] sm:$0xff]
    %v93 = vld [vmem:[#allocation4 + $0x10] sm:$0xff]
    %v94 = vld [vmem:[#allocation4 + $0x18] sm:$0xff]
    %vm95 = vcmask 261120
    %v97 = vsel %vm95, %v88, 0
    %99 = vmatpush.msra.mxu0 0.0
    %100 = vmatpush.msra.mxu0 0.0
    %101 = vmatpush.msra.mxu0 0.0
    %102 = vmatpush.msra.mxu0 0.0
    %103 = vmatpush.msra.mxu0 0.0
    %104 = vmatpush.msra.mxu0 0.0
    %105 = vmatpush.msra.mxu0 0.0
    %106 = vmatpush.msra.mxu0 0.0
    %107 = vmatpush.msra.mxu0 0.0
    %108 = vmatpush.msra.mxu0 0.0
    %109 = vmatpush.msra.mxu0 0.0
    %110 = vmatpush.msra.mxu0 0.0
    %111 = vmatpush.msra.mxu0 %v94
    %112 = vmatpush.msra.mxu0 %v93
    %113 = vmatpush.msra.mxu0 %v92
    %114 = vmatpush.msra.mxu0 %v91
    %115 = vmatmul.f32.gmra.mxu0 %v97
    %v116 = vpop.f32.mrf.mxu0
    %v117 = vadd.f32 0.0, %v116
    %118 = vdwg.mxu0
    %v119 = vadd.f32 %v90, %v117
    %v120 = vxor.u32 %v119, 2147483648
    %v121 = vmul.f32 %v120, 1.442695
    %v122 = vpow.pop %v121
    %v123 = vadd.f32 %v122, 1.0
    %v124 = vrcp.pop %v123
    %v125 = vmul.f32 %v123, %v124
    %v126 = vsub.f32 1.0, %v125
    %v127 = vmul.f32 %v124, %v126
    %v128 = vadd.f32 %v124, %v127
    %vm129 = vweird.f32 %v123
    %vm130 = vweird.f32 %v124
    %vm131 = vmor %vm129, %vm130
    %v132 = vsel %vm131, %v124, %v128
    %v133 = vand.u32 2147483647, %v123
    %vm134 = vcmp.eq.f32.partialorder %v133, 8.507059e+37
    %v135 = vand.u32 %v123, 2147483648
    %v136 = vor.u32 1.1754944e-38, %v135
    %v137 = vsel %vm134, %v136, %v132
    %v138 = vmul.f32 1.0, %v137
    %v139 = vtanh.pop %v119
    %141 = vrot.lane.b32.xlu0 %v89, 32
    %v142 = vpop.permute.xlu0 %141
    %v144 = vmul.f32 %v138, %v142
    %146 = vrot.lane.b32.xlu0 %v139, 64
    %v147 = vpop.permute.xlu0 %146
    %v149 = vmul.f32 %v138, %v147
    %151 = vrot.lane.b32.xlu0 %v149, 32
    %v152 = vpop.permute.xlu0 %151
    %v154 = vadd.f32 %v144, %v152
    %v155 = vtanh.pop %v154
    %157 = vrot.lane.b32.xlu0 %v155, 64
    %v158 = vpop.permute.xlu0 %157
    %v160 = vmul.f32 %v138, %v158
    %162 = vrot.lane.b32.xlu0 %v160, 32
    %v163 = vpop.permute.xlu0 %162
    %vm165 = vcmask 254976
    %166 = vst.msk [vmem:[#allocation12] sm:$0x3] %vm165, %v163
    %s167 = scalar_lea.vmem [#allocation6], 2
    %v168 = vld [vmem:[%s167] sm:$0x3]
    %v169 = vld [vmem:[#allocation4] sm:$0xff]
    %v170 = vld [vmem:[#allocation4 + $0x8] sm:$0xff]
    %v171 = vld [vmem:[#allocation4 + $0x10] sm:$0xff]
    %v172 = vld [vmem:[#allocation4 + $0x18] sm:$0xff]
    %v173 = vsel %vm95, %v163, 0
    %175 = vmatpush.msra.mxu0 0.0
    %176 = vmatpush.msra.mxu0 0.0
    %177 = vmatpush.msra.mxu0 0.0
    %178 = vmatpush.msra.mxu0 0.0
    %179 = vmatpush.msra.mxu0 0.0
    %180 = vmatpush.msra.mxu0 0.0
    %181 = vmatpush.msra.mxu0 0.0
    %182 = vmatpush.msra.mxu0 0.0
    %183 = vmatpush.msra.mxu0 0.0
    %184 = vmatpush.msra.mxu0 0.0
    %185 = vmatpush.msra.mxu0 0.0
    %186 = vmatpush.msra.mxu0 0.0
    %187 = vmatpush.msra.mxu0 %v172
    %188 = vmatpush.msra.mxu0 %v171
    %189 = vmatpush.msra.mxu0 %v170
    %190 = vmatpush.msra.mxu0 %v169
    %191 = vmatmul.f32.gmra.mxu0 %v173
    %v192 = vpop.f32.mrf.mxu0
    %v193 = vadd.f32 0.0, %v192
    %194 = vdwg.mxu0
    %v195 = vadd.f32 %v168, %v193
    %v196 = vxor.u32 %v195, 2147483648
    %v197 = vmul.f32 %v196, 1.442695
    %v198 = vpow.pop %v197
    %v199 = vadd.f32 %v198, 1.0
    %v200 = vrcp.pop %v199
    %v201 = vmul.f32 %v199, %v200
    %v202 = vsub.f32 1.0, %v201
    %v203 = vmul.f32 %v200, %v202
    %v204 = vadd.f32 %v200, %v203
    %vm205 = vweird.f32 %v199
    %vm206 = vweird.f32 %v200
    %vm207 = vmor %vm205, %vm206
    %v208 = vsel %vm207, %v200, %v204
    %v209 = vand.u32 2147483647, %v199
    %vm210 = vcmp.eq.f32.partialorder %v209, 8.507059e+37
    %v211 = vand.u32 %v199, 2147483648
    %v212 = vor.u32 1.1754944e-38, %v211
    %v213 = vsel %vm210, %v212, %v208
    %v214 = vmul.f32 1.0, %v213
    %v215 = vtanh.pop %v195
    %v216 = vmul.f32 %v214, %v154
    %218 = vrot.lane.b32.xlu0 %v215, 64
    %v219 = vpop.permute.xlu0 %218
    %v221 = vmul.f32 %v214, %v219
    %223 = vrot.lane.b32.xlu0 %v221, 32
    %v224 = vpop.permute.xlu0 %223
    %v226 = vadd.f32 %v216, %v224
    %v227 = vtanh.pop %v226
    %229 = vrot.lane.b32.xlu0 %v227, 64
    %v230 = vpop.permute.xlu0 %229
    %v232 = vmul.f32 %v214, %v230
    %234 = vrot.lane.b32.xlu0 %v232, 32
    %v235 = vpop.permute.xlu0 %234
    %s237 = scalar_lea.vmem [#allocation12], 2
    %238 = vst.msk [vmem:[%s237] sm:$0x3] %vm165, %v235
    %s239 = scalar_lea.vmem [#allocation6], 4
    %v240 = vld [vmem:[%s239] sm:$0x3]
    %v241 = vld [vmem:[#allocation4] sm:$0xff]
    %v242 = vld [vmem:[#allocation4 + $0x8] sm:$0xff]
    %v243 = vld [vmem:[#allocation4 + $0x10] sm:$0xff]
    %v244 = vld [vmem:[#allocation4 + $0x18] sm:$0xff]
    %v245 = vsel %vm95, %v235, 0
    %247 = vmatpush.msra.mxu0 0.0
    %248 = vmatpush.msra.mxu0 0.0
    %249 = vmatpush.msra.mxu0 0.0
    %250 = vmatpush.msra.mxu0 0.0
    %251 = vmatpush.msra.mxu0 0.0
    %252 = vmatpush.msra.mxu0 0.0
    %253 = vmatpush.msra.mxu0 0.0
    %254 = vmatpush.msra.mxu0 0.0
    %255 = vmatpush.msra.mxu0 0.0
    %256 = vmatpush.msra.mxu0 0.0
    %257 = vmatpush.msra.mxu0 0.0
    %258 = vmatpush.msra.mxu0 0.0
    %259 = vmatpush.msra.mxu0 %v244
    %260 = vmatpush.msra.mxu0 %v243
    %261 = vmatpush.msra.mxu0 %v242
    %262 = vmatpush.msra.mxu0 %v241
    %263 = vmatmul.f32.gmra.mxu0 %v245
    %v264 = vpop.f32.mrf.mxu0
    %v265 = vadd.f32 0.0, %v264
    %266 = vdwg.mxu0
    %v267 = vadd.f32 %v240, %v265
    %v268 = vxor.u32 %v267, 2147483648
    %v269 = vmul.f32 %v268, 1.442695
    %v270 = vpow.pop %v269
    %v271 = vadd.f32 %v270, 1.0
    %v272 = vrcp.pop %v271
    %v273 = vmul.f32 %v271, %v272
    %v274 = vsub.f32 1.0, %v273
    %v275 = vmul.f32 %v272, %v274
    %v276 = vadd.f32 %v272, %v275
    %vm277 = vweird.f32 %v271
    %vm278 = vweird.f32 %v272
    %vm279 = vmor %vm277, %vm278
    %v280 = vsel %vm279, %v272, %v276
    %v281 = vand.u32 2147483647, %v271
    %vm282 = vcmp.eq.f32.partialorder %v281, 8.507059e+37
    %v283 = vand.u32 %v271, 2147483648
    %v284 = vor.u32 1.1754944e-38, %v283
    %v285 = vsel %vm282, %v284, %v280
    %v286 = vmul.f32 1.0, %v285
    %v287 = vtanh.pop %v267
    %v288 = vmul.f32 %v286, %v226
    %290 = vrot.lane.b32.xlu0 %v287, 64
    %v291 = vpop.permute.xlu0 %290
    %v293 = vmul.f32 %v286, %v291
    %295 = vrot.lane.b32.xlu0 %v293, 32
    %v296 = vpop.permute.xlu0 %295
    %v298 = vadd.f32 %v288, %v296
    %v299 = vtanh.pop %v298
    %301 = vrot.lane.b32.xlu0 %v299, 64
    %v302 = vpop.permute.xlu0 %301
    %v304 = vmul.f32 %v286, %v302
    %306 = vrot.lane.b32.xlu0 %v304, 32
    %v307 = vpop.permute.xlu0 %306
    %s309 = scalar_lea.vmem [#allocation12], 4
    %310 = vst.msk [vmem:[%s309] sm:$0x3] %vm165, %v307
    %s311 = scalar_lea.vmem [#allocation6], 6
    %v312 = vld [vmem:[%s311] sm:$0x3]
    %v313 = vld [vmem:[#allocation4] sm:$0xff]
    %v314 = vld [vmem:[#allocation4 + $0x8] sm:$0xff]
    %v315 = vld [vmem:[#allocation4 + $0x10] sm:$0xff]
    %v316 = vld [vmem:[#allocation4 + $0x18] sm:$0xff]
    %v317 = vsel %vm95, %v307, 0
    %319 = vmatpush.msra.mxu0 0.0
    %320 = vmatpush.msra.mxu0 0.0
    %321 = vmatpush.msra.mxu0 0.0
    %322 = vmatpush.msra.mxu0 0.0
    %323 = vmatpush.msra.mxu0 0.0
    %324 = vmatpush.msra.mxu0 0.0
    %325 = vmatpush.msra.mxu0 0.0
    %326 = vmatpush.msra.mxu0 0.0
    %327 = vmatpush.msra.mxu0 0.0
    %328 = vmatpush.msra.mxu0 0.0
    %329 = vmatpush.msra.mxu0 0.0
    %330 = vmatpush.msra.mxu0 0.0
    %331 = vmatpush.msra.mxu0 %v316
    %332 = vmatpush.msra.mxu0 %v315
    %333 = vmatpush.msra.mxu0 %v314
    %334 = vmatpush.msra.mxu0 %v313
    %335 = vmatmul.f32.gmra.mxu0 %v317
    %v336 = vpop.f32.mrf.mxu0
    %v337 = vadd.f32 0.0, %v336
    %338 = vdwg.mxu0
    %v339 = vadd.f32 %v312, %v337
    %v340 = vxor.u32 %v339, 2147483648
    %v341 = vmul.f32 %v340, 1.442695
    %v342 = vpow.pop %v341
    %v343 = vadd.f32 %v342, 1.0
    %v344 = vrcp.pop %v343
    %v345 = vmul.f32 %v343, %v344
    %v346 = vsub.f32 1.0, %v345
    %v347 = vmul.f32 %v344, %v346
    %v348 = vadd.f32 %v344, %v347
    %vm349 = vweird.f32 %v343
    %vm350 = vweird.f32 %v344
    %vm351 = vmor %vm349, %vm350
    %v352 = vsel %vm351, %v344, %v348
    %v353 = vand.u32 2147483647, %v343
    %vm354 = vcmp.eq.f32.partialorder %v353, 8.507059e+37
    %v355 = vand.u32 %v343, 2147483648
    %v356 = vor.u32 1.1754944e-38, %v355
    %v357 = vsel %vm354, %v356, %v352
    %v358 = vmul.f32 1.0, %v357
    %v359 = vtanh.pop %v339
    %v360 = vmul.f32 %v358, %v298
    %362 = vrot.lane.b32.xlu0 %v359, 64
    %v363 = vpop.permute.xlu0 %362
    %v365 = vmul.f32 %v358, %v363
    %367 = vrot.lane.b32.xlu0 %v365, 32
    %v368 = vpop.permute.xlu0 %367
    %v370 = vadd.f32 %v360, %v368
    %v371 = vtanh.pop %v370
    %373 = vrot.lane.b32.xlu0 %v371, 64
    %v374 = vpop.permute.xlu0 %373
    %v376 = vmul.f32 %v358, %v374
    %378 = vrot.lane.b32.xlu0 %v376, 32
    %v379 = vpop.permute.xlu0 %378
    %s381 = scalar_lea.vmem [#allocation12], 6
    %382 = vst.msk [vmem:[%s381] sm:$0x3] %vm165, %v379
    %s383 = scalar_lea.vmem [#allocation6], 8
    %v384 = vld [vmem:[%s383] sm:$0x3]
    %v385 = vld [vmem:[#allocation4] sm:$0xff]
    %v386 = vld [vmem:[#allocation4 + $0x8] sm:$0xff]
    %v387 = vld [vmem:[#allocation4 + $0x10] sm:$0xff]
    %v388 = vld [vmem:[#allocation4 + $0x18] sm:$0xff]
    %v389 = vsel %vm95, %v379, 0
    %391 = vmatpush.msra.mxu0 0.0
    %392 = vmatpush.msra.mxu0 0.0
    %393 = vmatpush.msra.mxu0 0.0
    %394 = vmatpush.msra.mxu0 0.0
    %395 = vmatpush.msra.mxu0 0.0
    %396 = vmatpush.msra.mxu0 0.0
    %397 = vmatpush.msra.mxu0 0.0
    %398 = vmatpush.msra.mxu0 0.0
    %399 = vmatpush.msra.mxu0 0.0
    %400 = vmatpush.msra.mxu0 0.0
    %401 = vmatpush.msra.mxu0 0.0
    %402 = vmatpush.msra.mxu0 0.0
    %403 = vmatpush.msra.mxu0 %v388
    %404 = vmatpush.msra.mxu0 %v387
    %405 = vmatpush.msra.mxu0 %v386
    %406 = vmatpush.msra.mxu0 %v385
    %407 = vmatmul.f32.gmra.mxu0 %v389
    %v408 = vpop.f32.mrf.mxu0
    %v409 = vadd.f32 0.0, %v408
    %410 = vdwg.mxu0
    %v411 = vadd.f32 %v384, %v409
    %v412 = vxor.u32 %v411, 2147483648
    %v413 = vmul.f32 %v412, 1.442695
    %v414 = vpow.pop %v413
    %v415 = vadd.f32 %v414, 1.0
    %v416 = vrcp.pop %v415
    %v417 = vmul.f32 %v415, %v416
    %v418 = vsub.f32 1.0, %v417
    %v419 = vmul.f32 %v416, %v418
    %v420 = vadd.f32 %v416, %v419
    %vm421 = vweird.f32 %v415
    %vm422 = vweird.f32 %v416
    %vm423 = vmor %vm421, %vm422
    %v424 = vsel %vm423, %v416, %v420
    %v425 = vand.u32 2147483647, %v415
    %vm426 = vcmp.eq.f32.partialorder %v425, 8.507059e+37
    %v427 = vand.u32 %v415, 2147483648
    %v428 = vor.u32 1.1754944e-38, %v427
    %v429 = vsel %vm426, %v428, %v424
    %v430 = vmul.f32 1.0, %v429
    %v431 = vtanh.pop %v411
    %v432 = vmul.f32 %v430, %v370
    %434 = vrot.lane.b32.xlu0 %v431, 64
    %v435 = vpop.permute.xlu0 %434
    %v437 = vmul.f32 %v430, %v435
    %439 = vrot.lane.b32.xlu0 %v437, 32
    %v440 = vpop.permute.xlu0 %439
    %v442 = vadd.f32 %v432, %v440
    %v443 = vtanh.pop %v442
    %445 = vrot.lane.b32.xlu0 %v443, 64
    %v446 = vpop.permute.xlu0 %445
    %v448 = vmul.f32 %v430, %v446
    %450 = vrot.lane.b32.xlu0 %v448, 32
    %v451 = vpop.permute.xlu0 %450
    %s453 = scalar_lea.vmem [#allocation12], 8
    %454 = vst.msk [vmem:[%s453] sm:$0x3] %vm165, %v451
    %s455 = scalar_lea.vmem [#allocation6], 10
    %v456 = vld [vmem:[%s455] sm:$0x3]
    %v457 = vld [vmem:[#allocation4] sm:$0xff]
    %v458 = vld [vmem:[#allocation4 + $0x8] sm:$0xff]
    %v459 = vld [vmem:[#allocation4 + $0x10] sm:$0xff]
    %v460 = vld [vmem:[#allocation4 + $0x18] sm:$0xff]
    %v461 = vsel %vm95, %v451, 0
    %463 = vmatpush.msra.mxu0 0.0
    %464 = vmatpush.msra.mxu0 0.0
    %465 = vmatpush.msra.mxu0 0.0
    %466 = vmatpush.msra.mxu0 0.0
    %467 = vmatpush.msra.mxu0 0.0
    %468 = vmatpush.msra.mxu0 0.0
    %469 = vmatpush.msra.mxu0 0.0
    %470 = vmatpush.msra.mxu0 0.0
    %471 = vmatpush.msra.mxu0 0.0
    %472 = vmatpush.msra.mxu0 0.0
    %473 = vmatpush.msra.mxu0 0.0
    %474 = vmatpush.msra.mxu0 0.0
    %475 = vmatpush.msra.mxu0 %v460
    %476 = vmatpush.msra.mxu0 %v459
    %477 = vmatpush.msra.mxu0 %v458
    %478 = vmatpush.msra.mxu0 %v457
    %479 = vmatmul.f32.gmra.mxu0 %v461
    %v480 = vpop.f32.mrf.mxu0
    %v481 = vadd.f32 0.0, %v480
    %482 = vdwg.mxu0
    %v483 = vadd.f32 %v456, %v481
    %v484 = vxor.u32 %v483, 2147483648
    %v485 = vmul.f32 %v484, 1.442695
    %v486 = vpow.pop %v485
    %v487 = vadd.f32 %v486, 1.0
    %v488 = vrcp.pop %v487
    %v489 = vmul.f32 %v487, %v488
    %v490 = vsub.f32 1.0, %v489
    %v491 = vmul.f32 %v488, %v490
    %v492 = vadd.f32 %v488, %v491
    %vm493 = vweird.f32 %v487
    %vm494 = vweird.f32 %v488
    %vm495 = vmor %vm493, %vm494
    %v496 = vsel %vm495, %v488, %v492
    %v497 = vand.u32 2147483647, %v487
    %vm498 = vcmp.eq.f32.partialorder %v497, 8.507059e+37
    %v499 = vand.u32 %v487, 2147483648
    %v500 = vor.u32 1.1754944e-38, %v499
    %v501 = vsel %vm498, %v500, %v496
    %v502 = vmul.f32 1.0, %v501
    %v503 = vtanh.pop %v483
    %v504 = vmul.f32 %v502, %v442
    %506 = vrot.lane.b32.xlu0 %v503, 64
    %v507 = vpop.permute.xlu0 %506
    %v509 = vmul.f32 %v502, %v507
    %511 = vrot.lane.b32.xlu0 %v509, 32
    %v512 = vpop.permute.xlu0 %511
    %v514 = vadd.f32 %v504, %v512
    %v515 = vtanh.pop %v514
    %517 = vrot.lane.b32.xlu0 %v515, 64
    %v518 = vpop.permute.xlu0 %517
    %v520 = vmul.f32 %v502, %v518
    %522 = vrot.lane.b32.xlu0 %v520, 32
    %v523 = vpop.permute.xlu0 %522
    %s525 = scalar_lea.vmem [#allocation12], 10
    %526 = vst.msk [vmem:[%s525] sm:$0x3] %vm165, %v523
    %s527 = scalar_lea.vmem [#allocation6], 12
    %v528 = vld [vmem:[%s527] sm:$0x3]
    %v529 = vld [vmem:[#allocation4] sm:$0xff]
    %v530 = vld [vmem:[#allocation4 + $0x8] sm:$0xff]
    %v531 = vld [vmem:[#allocation4 + $0x10] sm:$0xff]
    %v532 = vld [vmem:[#allocation4 + $0x18] sm:$0xff]
    %v533 = vsel %vm95, %v523, 0
    %535 = vmatpush.msra.mxu0 0.0
    %536 = vmatpush.msra.mxu0 0.0
    %537 = vmatpush.msra.mxu0 0.0
    %538 = vmatpush.msra.mxu0 0.0
    %539 = vmatpush.msra.mxu0 0.0
    %540 = vmatpush.msra.mxu0 0.0
    %541 = vmatpush.msra.mxu0 0.0
    %542 = vmatpush.msra.mxu0 0.0
    %543 = vmatpush.msra.mxu0 0.0
    %544 = vmatpush.msra.mxu0 0.0
    %545 = vmatpush.msra.mxu0 0.0
    %546 = vmatpush.msra.mxu0 0.0
    %547 = vmatpush.msra.mxu0 %v532
    %548 = vmatpush.msra.mxu0 %v531
    %549 = vmatpush.msra.mxu0 %v530
    %550 = vmatpush.msra.mxu0 %v529
    %551 = vmatmul.f32.gmra.mxu0 %v533
    %v552 = vpop.f32.mrf.mxu0
    %v553 = vadd.f32 0.0, %v552
    %554 = vdwg.mxu0
    %v555 = vadd.f32 %v528, %v553
    %v556 = vxor.u32 %v555, 2147483648
    %v557 = vmul.f32 %v556, 1.442695
    %v558 = vpow.pop %v557
    %v559 = vadd.f32 %v558, 1.0
    %v560 = vrcp.pop %v559
    %v561 = vmul.f32 %v559, %v560
    %v562 = vsub.f32 1.0, %v561
    %v563 = vmul.f32 %v560, %v562
    %v564 = vadd.f32 %v560, %v563
    %vm565 = vweird.f32 %v559
    %vm566 = vweird.f32 %v560
    %vm567 = vmor %vm565, %vm566
    %v568 = vsel %vm567, %v560, %v564
    %v569 = vand.u32 2147483647, %v559
    %vm570 = vcmp.eq.f32.partialorder %v569, 8.507059e+37
    %v571 = vand.u32 %v559, 2147483648
    %v572 = vor.u32 1.1754944e-38, %v571
    %v573 = vsel %vm570, %v572, %v568
    %v574 = vmul.f32 1.0, %v573
    %v575 = vtanh.pop %v555
    %v576 = vmul.f32 %v574, %v514
    %578 = vrot.lane.b32.xlu0 %v575, 64
    %v579 = vpop.permute.xlu0 %578
    %v581 = vmul.f32 %v574, %v579
    %583 = vrot.lane.b32.xlu0 %v581, 32
    %v584 = vpop.permute.xlu0 %583
    %v586 = vadd.f32 %v576, %v584
    %v587 = vtanh.pop %v586
    %589 = vrot.lane.b32.xlu0 %v587, 64
    %v590 = vpop.permute.xlu0 %589
    %v592 = vmul.f32 %v574, %v590
    %594 = vrot.lane.b32.xlu0 %v592, 32
    %v595 = vpop.permute.xlu0 %594
    %s597 = scalar_lea.vmem [#allocation12], 12
    %598 = vst.msk [vmem:[%s597] sm:$0x3] %vm165, %v595
    %s599 = scalar_lea.vmem [#allocation6], 14
    %v600 = vld [vmem:[%s599] sm:$0x3]
    %v601 = vld [vmem:[#allocation4] sm:$0xff]
    %v602 = vld [vmem:[#allocation4 + $0x8] sm:$0xff]
    %v603 = vld [vmem:[#allocation4 + $0x10] sm:$0xff]
    %v604 = vld [vmem:[#allocation4 + $0x18] sm:$0xff]
    %v605 = vsel %vm95, %v595, 0
    %607 = vmatpush.msra.mxu0 0.0
    %608 = vmatpush.msra.mxu0 0.0
    %609 = vmatpush.msra.mxu0 0.0
    %610 = vmatpush.msra.mxu0 0.0
    %611 = vmatpush.msra.mxu0 0.0
    %612 = vmatpush.msra.mxu0 0.0
    %613 = vmatpush.msra.mxu0 0.0
    %614 = vmatpush.msra.mxu0 0.0
    %615 = vmatpush.msra.mxu0 0.0
    %616 = vmatpush.msra.mxu0 0.0
    %617 = vmatpush.msra.mxu0 0.0
    %618 = vmatpush.msra.mxu0 0.0
    %619 = vmatpush.msra.mxu0 %v604
    %620 = vmatpush.msra.mxu0 %v603
    %621 = vmatpush.msra.mxu0 %v602
    %622 = vmatpush.msra.mxu0 %v601
    %623 = vmatmul.f32.gmra.mxu0 %v605
    %v624 = vpop.f32.mrf.mxu0
    %v625 = vadd.f32 0.0, %v624
    %626 = vdwg.mxu0
    %v627 = vadd.f32 %v600, %v625
    %v628 = vxor.u32 %v627, 2147483648
    %v629 = vmul.f32 %v628, 1.442695
    %v630 = vpow.pop %v629
    %v631 = vadd.f32 %v630, 1.0
    %v632 = vrcp.pop %v631
    %v633 = vmul.f32 %v631, %v632
    %v634 = vsub.f32 1.0, %v633
    %v635 = vmul.f32 %v632, %v634
    %v636 = vadd.f32 %v632, %v635
    %vm637 = vweird.f32 %v631
    %vm638 = vweird.f32 %v632
    %vm639 = vmor %vm637, %vm638
    %v640 = vsel %vm639, %v632, %v636
    %v641 = vand.u32 2147483647, %v631
    %vm642 = vcmp.eq.f32.partialorder %v641, 8.507059e+37
    %v643 = vand.u32 %v631, 2147483648
    %v644 = vor.u32 1.1754944e-38, %v643
    %v645 = vsel %vm642, %v644, %v640
    %v646 = vmul.f32 1.0, %v645
    %v647 = vtanh.pop %v627
    %v648 = vmul.f32 %v646, %v586
    %650 = vrot.lane.b32.xlu0 %v647, 64
    %v651 = vpop.permute.xlu0 %650
    %v653 = vmul.f32 %v646, %v651
    %655 = vrot.lane.b32.xlu0 %v653, 32
    %v656 = vpop.permute.xlu0 %655
    %v658 = vadd.f32 %v648, %v656
    %v659 = vtanh.pop %v658
    %661 = vrot.lane.b32.xlu0 %v659, 64
    %v662 = vpop.permute.xlu0 %661
    %v664 = vmul.f32 %v646, %v662
    %666 = vrot.lane.b32.xlu0 %v664, 32
    %v667 = vpop.permute.xlu0 %666
    %s669 = scalar_lea.vmem [#allocation12], 14
    %670 = vst.msk [vmem:[%s669] sm:$0x3] %vm165, %v667
    %671 = vst.msk [vmem:[#allocation2] sm:$0x3] %vm165, %v667
    %673 = vrot.lane.b32.xlu0 %v658, 96
    %v674 = vpop.permute.xlu0 %673
    %676 = vst.msk [vmem:[#allocation3] sm:$0x3] %vm165, %v674
    // Predicated region
    $region34: #{tpu_custom_call.1} parent=1 // pred_check
      %p677 = pneg %p63
    $region35: #{tpu_custom_call.1} parent=1 // pred_check_branch
      %679 = sbr.rel (%p677) target = $region37
    $region36: #{tpu_custom_call.1} parent=1 // pred_region
      %680 = vst.msk [vmem:[#allocation13] sm:$0x3] %vm165, %v667
      %681 = vst.msk [vmem:[#allocation15] sm:$0x3] %vm165, %v674
    $region37: #{tpu_custom_call.1} parent=1 // pred_fallthru
      _
    // Predicated region
    $region38: #{tpu_custom_call.1} parent=1 // pred_check
      _
    $region39: #{tpu_custom_call.1} parent=1 // pred_check_branch
      %683 = sbr.rel (0) target = $region41
    $region40: #{tpu_custom_call.1} parent=1 // pred_region
      %685 = vsyncadd [#allocation8], 0
      %s686 = sshll.u32 [#allocation12], 4
      %s687 = int_to_ptr.vmem [resolvable:$true] %s686
      %s688 = sshll.u32 %s4, 4
      %s689 = int_to_ptr.hbm [resolvable:$true] %s688
      %694 = dma.vmem_to_hbm [thread:$0]  %s687, 256, %s689, [#allocation8], 32, 32, 2
    $region41: #{tpu_custom_call.1} parent=1 // pred_fallthru
      _
    // Predicated region
    $region42: #{tpu_custom_call.1} parent=1 // pred_check
      _
    $region43: #{tpu_custom_call.1} parent=1 // pred_check_branch
      %696 = sbr.rel (0) target = $region45
    $region44: #{tpu_custom_call.1} parent=1 // pred_region
      %698 = vsyncadd [#allocation14], 0
      %s700 = sshll.u32 [#allocation13], 4
      %s701 = int_to_ptr.vmem [resolvable:$true] %s700
      %s702 = sshll.u32 %s5, 4
      %s703 = int_to_ptr.hbm [resolvable:$true] %s702
      %705 = dma.vmem_to_hbm [thread:$0]  %s701, 32, %s703, [#allocation14]
    $region45: #{tpu_custom_call.1} parent=1 // pred_fallthru
      _
    // Predicated region
    $region46: #{tpu_custom_call.1} parent=1 // pred_check
      _
    $region47: #{tpu_custom_call.1} parent=1 // pred_check_branch
      %707 = sbr.rel (0) target = $region49
    $region48: #{tpu_custom_call.1} parent=1 // pred_region
      %709 = vsyncadd [#allocation14], 0
      %s711 = sshll.u32 [#allocation15], 4
      %s712 = int_to_ptr.vmem [resolvable:$true] %s711
      %s713 = sshll.u32 %s6, 4
      %s714 = int_to_ptr.hbm [resolvable:$true] %s713
      %716 = dma.vmem_to_hbm [thread:$0]  %s712, 32, %s714, [#allocation14]
    $region49: #{tpu_custom_call.1} parent=1 // pred_fallthru
      _
    // Predicated region
    $region50: #{tpu_custom_call.1} parent=1 // pred_check
      _
    $region51: #{tpu_custom_call.1} parent=1 // pred_check_branch
      %718 = sbr.rel (0) target = $region53
    $region52: #{tpu_custom_call.1} parent=1 // pred_region
      %720 = dma.done [#allocation8], 256
    $region53: #{tpu_custom_call.1} parent=1 // pred_fallthru
      _
    // Predicated region
    $region54: #{tpu_custom_call.1} parent=1 // pred_check
      _
    $region55: #{tpu_custom_call.1} parent=1 // pred_check_branch
      %722 = sbr.rel (0) target = $region57
    $region56: #{tpu_custom_call.1} parent=1 // pred_region
      %724 = dma.done [#allocation14], 32
    $region57: #{tpu_custom_call.1} parent=1 // pred_fallthru
      _
    // Predicated region
    $region58: #{tpu_custom_call.1} parent=1 // pred_check
      _
    $region59: #{tpu_custom_call.1} parent=1 // pred_check_branch
      %726 = sbr.rel (0) target = $region61
    $region60: #{tpu_custom_call.1} parent=1 // pred_region
      %728 = dma.done [#allocation14], 32
    $region61: #{tpu_custom_call.1} parent=1 // pred_fallthru
      _
    %729 = vsyncpa [#allocation7], 1
    %730 = vsyncpa [#allocation10], 1
    %731 = vsyncpa [#allocation8], 1
    %732 = vsyncpa [#allocation14], 1
  %733 = vsyncmov [#allocation5]
  %s734 = vpop.sfrf %733
  %p735 = scmp.eq.s32.totalorder %s734, 0
  %p736 = pneg %p735
  %738 = shalt.err (%p736)

</llo_original>
